<compile_context>
chip_gen: v5e
topology: v5e:2x2
jax: 0.10.0
libtpu: 0.0.40
codegen_flags: <defaults>
</compile_context>

<pallas_src>
import functools

import jax
import jax.numpy as jnp
import numpy as np
from jax.experimental import pallas as pl
from jax.experimental.pallas import tpu as pltpu


def _round_up(x, m):
    return ((x + m - 1) // m) * m


def _gnn_layer_kernel(l_ref, fk_ref, fr_ref, w1_ref, w2_ref, s_ref, out_ref,
                      acc_ref, *, tk, l_scale, feats_resident):
    k = pl.program_id(1)

    @pl.when(k == 0)
    def _init():
        acc_ref[...] = jnp.zeros_like(acc_ref)

    if feats_resident:
        # feats is fully VMEM-resident; slice the K-window of the single buffer.
        start = pl.multiple_of(k * tk, tk)
        fk = fk_ref[pl.ds(start, tk), :]
    else:
        fk = fk_ref[...]

    # Dominant matmul: 1-byte (or bf16) adjacency tile upcast on the VPU, bf16 MXU
    # operands, f32 accumulation.
    acc_ref[...] += jnp.dot(l_ref[...].astype(jnp.bfloat16), fk,
                            preferred_element_type=jnp.float32)

    @pl.when(k == pl.num_programs(1) - 1)
    def _finalize():
        le = acc_ref[...]
        if l_scale != 1.0:                      # fold scalar adjacency scale once
            le = le * l_scale
        fr = fr_ref[...].astype(jnp.float32)    # this row-tile's feats
        e = le * fr                             # E = LE * feats
        y = (jnp.dot(le.astype(jnp.bfloat16), w1_ref[...],
                     preferred_element_type=jnp.float32)
             + jnp.dot(e.astype(jnp.bfloat16), w2_ref[...],
                       preferred_element_type=jnp.float32)
             + s_ref[...])                      # (SelfLoop@feats)@W1.T + b1 + b2
        out_ref[...] = y.astype(out_ref.dtype)


def gnn_layer_forward(L, SelfLoop, feats, W1, b1, W2, b2, *, tm=None, tk=None):
    N, f_in = feats.shape
    f_out = W1.shape[0]
    f_out_pad = max(128, _round_up(f_out, 128))

    # ------------------------------------------------------------------ tiling
    def _pick(cands, allow_single_tile):
        best = 128
        budget = max(128, N // 8)               # keep zero-padding bounded (~12.5%)
        for c in cands:
            if c > _round_up(N, 128):
                break
            if _round_up(N, c) - N > budget:
                continue
            if (not allow_single_tile) and (_round_up(N, c) // c < 2) and c != 128:
                continue                        # keep >=2 row tiles for 2-TC chips
            best = c
        return best

    if tk is None:
        tk = _pick((128, 256, 512, 1024, 2048), allow_single_tile=True)
    if tm is None:
        tm = _pick((128, 256, 512), allow_single_tile=False)

    N_pad = _round_up(N, max(tm, tk))           # tm, tk are power-of-two * 128
    pad_n = N_pad - N

    feats_f32 = feats.astype(jnp.float32)

    # ------------------------- SelfLoop / bias term (precomputed, never in kernel)
    diag_sl = None
    try:
        sl_np = np.asarray(SelfLoop)
        if np.array_equal(sl_np, np.diag(np.diagonal(sl_np))):
            diag_sl = jnp.asarray(np.diagonal(sl_np).astype(np.float32)).reshape(N, 1)
    except Exception:
        diag_sl = None
    if diag_sl is not None:
        sl_feats = diag_sl * feats_f32
    else:
        # TODO(synk): non-diagonal / traced SelfLoop -> one dense XLA matmul outside
        # the kernel (exact, but costs an extra [N,N] x [N,f_in] contraction).
        sl_feats = SelfLoop.astype(jnp.float32) @ feats_f32
    s_full = (sl_feats @ W1.T.astype(jnp.float32)
              + (b1 + b2).astype(jnp.float32).reshape(1, f_out))
    s_pad = jnp.zeros((N_pad, f_out_pad), jnp.float32).at[:N, :f_out].set(s_full)

    # --------------------------- adjacency storage: int8 {0,1} when exact, else bf16
    l_scale = 1.0
    l_arr = None
    try:
        l_np = np.asarray(L)                    # fails for traced inputs -> bf16 path
        nz = l_np[l_np != 0]
        if nz.size == 0:
            l_arr = jnp.zeros((N_pad, N_pad), jnp.int8)
        else:
            s = float(nz[0])
            if np.all((l_np == 0) | (l_np == s)):
                l_scale = s
                l_arr = jnp.asarray(np.pad((l_np != 0).astype(np.int8),
                                           ((0, pad_n), (0, pad_n))))
    except Exception:
        l_arr = None
    if l_arr is None:
        l_scale = 1.0
        l_arr = jnp.pad(L.astype(jnp.bfloat16), ((0, pad_n), (0, pad_n)))

    feats_bf = jnp.pad(feats.astype(jnp.bfloat16), ((0, pad_n), (0, 0)))

    # Pre-transposed, lane-dense, bf16 weights.
    w1t = jnp.zeros((f_in, f_out_pad), jnp.bfloat16).at[:, :f_out].set(
        W1.T.astype(jnp.bfloat16))
    w2t = jnp.zeros((f_in, f_out_pad), jnp.bfloat16).at[:, :f_out].set(
        W2.T.astype(jnp.bfloat16))

    # ----------------------------------------- feats residency + VMEM budgeting
    try:
        kind = jax.devices()[0].device_kind.lower()
    except Exception:
        kind = ""
    is_v7 = ("v7" in kind) or ("7x" in kind)
    resident_budget = (8 << 20) if is_v7 else (16 << 20)   # v7x has 64 MiB VMEM
    feats_kop_bytes = 2 * N_pad * f_in * 2                 # double-buffered bf16
    feats_resident = feats_kop_bytes <= resident_budget

    l_item = 1 if l_arr.dtype == jnp.int8 else 2
    vmem_est = (2 * tm * tk * l_item
                + (feats_kop_bytes if feats_resident else 2 * tk * f_in * 2)
                + 2 * tm * f_in * 2
                + 2 * 2 * f_in * f_out_pad * 2
                + 2 * tm * f_out_pad * 4       # S row tiles
                + 2 * tm * f_out_pad * 4       # output tiles
                + tm * f_in * 4)               # accumulator
    vmem_limit = int(min(48 << 20, max(24 << 20, (vmem_est * 3) // 2)))

    grid = (N_pad // tm, N_pad // tk)

    if feats_resident:
        fk_spec = pl.BlockSpec((N_pad, f_in), lambda i, k: (0, 0))   # fetched once
    else:
        fk_spec = pl.BlockSpec((tk, f_in), lambda i, k: (k, 0))

    kernel = functools.partial(_gnn_layer_kernel, tk=tk, l_scale=float(l_scale),
                               feats_resident=feats_resident)

    out_pad = pl.pallas_call(
        kernel,
        out_shape=jax.ShapeDtypeStruct((N_pad, f_out_pad), jnp.float32),
        grid_spec=pltpu.PrefetchScalarGridSpec(
            num_scalar_prefetch=0,
            grid=grid,
            in_specs=[
                pl.BlockSpec((tm, tk), lambda i, k: (i, k)),            # L tile
                fk_spec,                                                # feats (K operand)
                pl.BlockSpec((tm, f_in), lambda i, k: (i, 0)),          # feats row tile
                pl.BlockSpec((f_in, f_out_pad), lambda i, k: (0, 0)),   # W1^T (bf16)
                pl.BlockSpec((f_in, f_out_pad), lambda i, k: (0, 0)),   # W2^T (bf16)
                pl.BlockSpec((tm, f_out_pad), lambda i, k: (i, 0)),     # SelfLoop/bias term
            ],
            out_specs=pl.BlockSpec((tm, f_out_pad), lambda i, k: (i, 0)),
            scratch_shapes=[pltpu.VMEM((tm, f_in), jnp.float32)],
        ),
        compiler_params=pltpu.CompilerParams(
            dimension_semantics=("parallel", "arbitrary"),
            vmem_limit_bytes=vmem_limit),
    )(l_arr, feats_bf, feats_bf, w1t, w2t, s_pad)

    return out_pad[:N, :f_out].astype(feats.dtype)


def gnn_layer_ref(L, SelfLoop, feats, W1, b1, W2, b2):
    sf_L = L + SelfLoop
    sf_E = sf_L @ feats
    left = sf_E @ W1.T + b1
    LE = L @ feats
    E = LE * feats
    right = E @ W2.T + b2
    return left + right


if __name__ == "__main__":
    N, in_feats, out_feats = 256, 64, 32
    key = jax.random.PRNGKey(0)
    k_l, k_f, k_w1, k_b1, k_w2, k_b2 = jax.random.split(key, 6)

    # Deterministic synthetic inputs (dense normalized adjacency + identity self-loop).
    L = (jax.random.uniform(k_l, (N, N), jnp.float32) < 0.05).astype(jnp.float32) / N
    SelfLoop = jnp.eye(N, dtype=jnp.float32)
    feats = jax.random.normal(k_f, (N, in_feats), jnp.float32)

    # nn.Linear parameter shapes: W [out_feats, in_feats], b [out_feats]
    bound = 1.0 / jnp.sqrt(in_feats)
    W1 = jax.random.uniform(k_w1, (out_feats, in_feats), jnp.float32, -bound, bound)
    b1 = jax.random.uniform(k_b1, (out_feats,), jnp.float32, -bound, bound)
    W2 = jax.random.uniform(k_w2, (out_feats, in_feats), jnp.float32, -bound, bound)
    b2 = jax.random.uniform(k_b2, (out_feats,), jnp.float32, -bound, bound)

    out = gnn_layer_forward(L, SelfLoop, feats, W1, b1, W2, b2)
    out = jax.block_until_ready(out)

    ref = gnn_layer_ref(L, SelfLoop, feats, W1, b1, W2, b2)
    assert out.shape == (N, out_feats)
    max_err = float(jnp.max(jnp.abs(out - ref)))
    assert jnp.allclose(out, ref, atol=1e-2, rtol=1e-2), max_err

    print("KERNEL_OK")
</pallas_src>

<mosaic_0001>
module attributes {stable_mosaic.version = 11 : i64} {
  func.func @_gnn_layer_kernel(%arg0: i32, %arg1: i32, %arg2: memref<128x256xi8, #tpu.memory_space<vmem>>, %arg3: memref<256x64xbf16, #tpu.memory_space<vmem>>, %arg4: memref<128x64xbf16, #tpu.memory_space<vmem>>, %arg5: memref<64x128xbf16, #tpu.memory_space<vmem>>, %arg6: memref<64x128xbf16, #tpu.memory_space<vmem>>, %arg7: memref<128x128xf32, #tpu.memory_space<vmem>>, %arg8: memref<128x128xf32, #tpu.memory_space<vmem>>, %arg9: memref<128x64xf32, #tpu.memory_space<vmem>>) attributes {dimension_semantics = [#tpu.dimension_semantics<parallel>, #tpu.dimension_semantics<arbitrary>], iteration_bounds = array<i64: 2, 1>, scalar_prefetch = 0 : i64, scratch_operands = 1 : i64, tpu.core_type = #tpu.core_type<tc>, window_params = [{transform_indices = @transform_0, window_bounds = array<i64: 128, 256>}, {pipeline_mode = #tpu.pipeline_mode<synchronous>, transform_indices = @transform_1, window_bounds = array<i64: 256, 64>}, {transform_indices = @transform_2, window_bounds = array<i64: 128, 64>}, {pipeline_mode = #tpu.pipeline_mode<synchronous>, transform_indices = @transform_3, window_bounds = array<i64: 64, 128>}, {pipeline_mode = #tpu.pipeline_mode<synchronous>, transform_indices = @transform_4, window_bounds = array<i64: 64, 128>}, {transform_indices = @transform_5, window_bounds = array<i64: 128, 128>}, {transform_indices = @transform_6, window_bounds = array<i64: 128, 128>}]} {
    %c0_i32 = arith.constant 0 : i32
    %0 = arith.cmpi eq, %arg1, %c0_i32 : i32
    %1 = arith.extui %0 : i1 to i32
    %c0_i32_0 = arith.constant 0 : i32
    %2 = arith.cmpi ne, %1, %c0_i32_0 : i32
    scf.if %2 {
      %cst_9 = arith.constant 0.000000e+00 : f32
      %16 = vector.broadcast %cst_9 : f32 to vector<128x64xf32>
      %c0_10 = arith.constant 0 : index
      %c0_11 = arith.constant 0 : index
      %17 = vector.load %arg9[%c0_10, %c0_11] : memref<128x64xf32, #tpu.memory_space<vmem>>, vector<128x64xf32>
      tpu.vector_store %arg9[%c0_10, %c0_11], %16 {strides = array<i32>} : memref<128x64xf32, #tpu.memory_space<vmem>>, vector<128x64xf32>,
    } else {
    }
    %c256_i32 = arith.constant 256 : i32
    %3 = arith.muli %arg1, %c256_i32 : i32
    %4 = tpu.assume_multiple %3, 256 : i32
    %5 = arith.index_cast %4 : i32 to index
    %c0 = arith.constant 0 : index
    %6 = vector.load %arg3[%5, %c0] : memref<256x64xbf16, #tpu.memory_space<vmem>>, vector<256x64xbf16>
    %c0_1 = arith.constant 0 : index
    %c0_2 = arith.constant 0 : index
    %7 = vector.load %arg9[%c0_1, %c0_2] : memref<128x64xf32, #tpu.memory_space<vmem>>, vector<128x64xf32>
    %c0_3 = arith.constant 0 : index
    %c0_4 = arith.constant 0 : index
    %8 = vector.load %arg2[%c0_3, %c0_4] : memref<128x256xi8, #tpu.memory_space<vmem>>, vector<128x256xi8>
    %9 = arith.sitofp %8 : vector<128x256xi8> to vector<128x256xbf16>
    %cst = arith.constant dense<0.000000e+00> : vector<128x64xf32>
    %10 = tpu.matmul %9, %6, %cst {dimension_numbers = #tpu.dot_dimension_numbers<[1], [0], [0], [1], [0, 0, 1, 1], [], []>} : vector<128x256xbf16>, vector<256x64xbf16>, vector<128x64xf32> -> vector<128x64xf32>
    %11 = arith.addf %7, %10 : vector<128x64xf32>
    %c0_5 = arith.constant 0 : index
    %c0_6 = arith.constant 0 : index
    %12 = vector.load %arg9[%c0_5, %c0_6] : memref<128x64xf32, #tpu.memory_space<vmem>>, vector<128x64xf32>
    tpu.vector_store %arg9[%c0_5, %c0_6], %11 {strides = array<i32>} : memref<128x64xf32, #tpu.memory_space<vmem>>, vector<128x64xf32>,
    %c0_i32_7 = arith.constant 0 : i32
    %13 = arith.cmpi eq, %arg1, %c0_i32_7 : i32
    %14 = arith.extui %13 : i1 to i32
    %c0_i32_8 = arith.constant 0 : i32
    %15 = arith.cmpi ne, %14, %c0_i32_8 : i32
    scf.if %15 {
      %c0_9 = arith.constant 0 : index
      %c0_10 = arith.constant 0 : index
      %16 = vector.load %arg9[%c0_9, %c0_10] : memref<128x64xf32, #tpu.memory_space<vmem>>, vector<128x64xf32>
      %cst_11 = arith.constant 3.906250e-03 : f32
      %17 = vector.broadcast %cst_11 : f32 to vector<128x64xf32>
      %18 = arith.mulf %16, %17 : vector<128x64xf32>
      %c0_12 = arith.constant 0 : index
      %c0_13 = arith.constant 0 : index
      %19 = vector.load %arg4[%c0_12, %c0_13] : memref<128x64xbf16, #tpu.memory_space<vmem>>, vector<128x64xbf16>
      %20 = arith.extf %19 : vector<128x64xbf16> to vector<128x64xf32>
      %21 = arith.mulf %18, %20 : vector<128x64xf32>
      %22 = arith.truncf %18 : vector<128x64xf32> to vector<128x64xbf16>
      %c0_14 = arith.constant 0 : index
      %c0_15 = arith.constant 0 : index
      %23 = vector.load %arg5[%c0_14, %c0_15] : memref<64x128xbf16, #tpu.memory_space<vmem>>, vector<64x128xbf16>
      %cst_16 = arith.constant dense<0.000000e+00> : vector<128x128xf32>
      %24 = tpu.matmul %22, %23, %cst_16 {dimension_numbers = #tpu.dot_dimension_numbers<[1], [0], [0], [1], [0, 0, 1, 1], [], []>} : vector<128x64xbf16>, vector<64x128xbf16>, vector<128x128xf32> -> vector<128x128xf32>
      %25 = arith.truncf %21 : vector<128x64xf32> to vector<128x64xbf16>
      %c0_17 = arith.constant 0 : index
      %c0_18 = arith.constant 0 : index
      %26 = vector.load %arg6[%c0_17, %c0_18] : memref<64x128xbf16, #tpu.memory_space<vmem>>, vector<64x128xbf16>
      %cst_19 = arith.constant dense<0.000000e+00> : vector<128x128xf32>
      %27 = tpu.matmul %25, %26, %cst_19 {dimension_numbers = #tpu.dot_dimension_numbers<[1], [0], [0], [1], [0, 0, 1, 1], [], []>} : vector<128x64xbf16>, vector<64x128xbf16>, vector<128x128xf32> -> vector<128x128xf32>
      %28 = arith.addf %24, %27 : vector<128x128xf32>
      %c0_20 = arith.constant 0 : index
      %c0_21 = arith.constant 0 : index
      %29 = vector.load %arg7[%c0_20, %c0_21] : memref<128x128xf32, #tpu.memory_space<vmem>>, vector<128x128xf32>
      %30 = arith.addf %28, %29 : vector<128x128xf32>
      %c0_22 = arith.constant 0 : index
      %c0_23 = arith.constant 0 : index
      %31 = vector.load %arg8[%c0_22, %c0_23] : memref<128x128xf32, #tpu.memory_space<vmem>>, vector<128x128xf32>
      tpu.vector_store %arg8[%c0_22, %c0_23], %30 {strides = array<i32>} : memref<128x128xf32, #tpu.memory_space<vmem>>, vector<128x128xf32>,
    } else {
    }
    return
  }
  func.func @transform_0(%arg0: i32, %arg1: i32) -> (i32, i32) {
    %c0_i32 = arith.constant 0 : i32
    return %arg0, %arg1 : i32, i32
  }
  func.func @transform_1(%arg0: i32, %arg1: i32) -> (i32, i32) {
    %c0_i32 = arith.constant 0 : i32
    %c0_i32_0 = arith.constant 0 : i32
    %c0_i32_1 = arith.constant 0 : i32
    return %c0_i32, %c0_i32_0 : i32, i32
  }
  func.func @transform_2(%arg0: i32, %arg1: i32) -> (i32, i32) {
    %c0_i32 = arith.constant 0 : i32
    %c0_i32_0 = arith.constant 0 : i32
    return %arg0, %c0_i32 : i32, i32
  }
  func.func @transform_3(%arg0: i32, %arg1: i32) -> (i32, i32) {
    %c0_i32 = arith.constant 0 : i32
    %c0_i32_0 = arith.constant 0 : i32
    %c0_i32_1 = arith.constant 0 : i32
    return %c0_i32, %c0_i32_0 : i32, i32
  }
  func.func @transform_4(%arg0: i32, %arg1: i32) -> (i32, i32) {
    %c0_i32 = arith.constant 0 : i32
    %c0_i32_0 = arith.constant 0 : i32
    %c0_i32_1 = arith.constant 0 : i32
    return %c0_i32, %c0_i32_0 : i32, i32
  }
  func.func @transform_5(%arg0: i32, %arg1: i32) -> (i32, i32) {
    %c0_i32 = arith.constant 0 : i32
    %c0_i32_0 = arith.constant 0 : i32
    return %arg0, %c0_i32 : i32, i32
  }
  func.func @transform_6(%arg0: i32, %arg1: i32) -> (i32, i32) {
    %c0_i32 = arith.constant 0 : i32
    %c0_i32_0 = arith.constant 0 : i32
    return %arg0, %c0_i32 : i32, i32
  }
}

</mosaic_0001>

<llo_original>
// kernel: tpu_custom_call.1
$region0: #{tpu_custom_call.1}
  #allocation0 [shape = 'u32[]', space=smem, size = 0x4, offset = 0x4, fixed_abs, tag = 'smem constant byte address 0x4 - core index']
  #allocation1 [shape = 'u32[72,128]{1,0:T(1,128)}', space=vmem, size = 0x9000, scoped, tag = 'internal scratch']
  #allocation2 [shape = 'f32[128,64]{1,0:T(8,128)}', space=vmem, size = 0x10000, scoped, tag = 'scratch operand']
  %s0 = inlined_call_operand.hbm [shape: s8[256,256], index: 0, kind: input, shape index: {}]
  %s1 = inlined_call_operand.vmem [shape: bf16[256,64], index: 1, kind: input, shape index: {}]
  %s2 = inlined_call_operand.vmem [shape: bf16[256,64], index: 2, kind: input, shape index: {}]
  %s3 = inlined_call_operand.vmem [shape: bf16[64,128], index: 3, kind: input, shape index: {}]
  %s4 = inlined_call_operand.vmem [shape: bf16[64,128], index: 4, kind: input, shape index: {}]
  %s5 = inlined_call_operand.vmem [shape: f32[256,128], index: 5, kind: input, shape index: {}]
  %s6 = inlined_call_operand.hbm [shape: f32[256,128], index: 6, kind: output, shape index: {}]
  %s7 = sld [smem:[#allocation0]]
  $region69: #{tpu_custom_call.1} parent=0
    _
  %s9 = ssub.s32 1, %s7
  %s10 = scalar_select 0, %s9, %s7
  $region1: #{tpu_custom_call.1} parent=0
    #allocation3 [shape = 'u8[65536]{0}', space=vmem, size = 0x10000, scoped, tag = 'input window, operand 0']
    #allocation4 [shape = 's32[2]{0}', space=sflag, size = 0x8, scoped, tag = 'scoped memory for tpu_custom_call.1']
    #allocation5 [shape = 's32[2]{0}', space=sflag, size = 0x8, scoped, tag = 'scoped memory for tpu_custom_call.1']
    #allocation6 [shape = 'u8[131072]{0}', space=vmem, size = 0x20000, scoped, tag = 'output window, operand 0']
    %11 = vsyncpa [#allocation4], 0
    %s12 = scalar_lea.sflag [#allocation4], 1
    %13 = vsyncpa %s12, 0
    %14 = vsyncpa [#allocation5], 0
    %s15 = scalar_lea.sflag [#allocation5], 1
    %16 = vsyncpa %s15, 0
    loop: start=0, step=1, limit=4
    $region2: #{tpu_custom_call.1} parent=1 // loop_pre_header
      _
    $region3: #{tpu_custom_call.1} parent=1 // loop_header
      %s18 = sphi 0, %s22
      %p19 = scmp.ge.s32.totalorder %s18, 4
      %s25 = sphi 0, %s37
      %s26 = sphi 0, %s33
      %s27 = sphi 0, %s25
      %s28 = sphi 0, %s26
      %s29 = sphi 0, %s27
      %s30 = sphi 0, %s28
      %s42 = sphi 0, %s44
      %s45 = sphi 0, %s42
      %s46 = sphi 0, %s45
      %s62 = sphi 0, %s46
      %s66 = sphi 0, %s66
      %s68 = sphi 0, %s66
      %s69 = sphi 0, %s68
      %s83 = sphi 0, %s69
      %s89 = sphi 0, %s91
      %s92 = sphi 0, %s89
      %s93 = sphi 0, %s92
      %s109 = sphi 0, %s93
      %s113 = sphi 0, %s113
      %s115 = sphi 0, %s113
      %s116 = sphi 0, %s115
      %s130 = sphi 0, %s116
      %s134 = sphi 0, %s134
      %s136 = sphi 0, %s134
      %s137 = sphi 0, %s136
      %s151 = sphi 0, %s137
      %s157 = sphi 0, %s159
      %s160 = sphi 0, %s157
      %s161 = sphi 0, %s160
      %s177 = sphi 0, %s161
      %s183 = sphi 0, %s185
      %s186 = sphi 0, %s183
      %s187 = sphi 0, %s186
      %s203 = sphi 0, %s187
    $region4: #{tpu_custom_call.1} parent=1 // loop_header_branch
      %21 = sbr.rel (%p19) target = $region8
    $region5: #{tpu_custom_call.1} parent=1 // loop_body
      %s23 = ssub.s32 %s18, 1
      %s24 = ssub.s32 %s18, 2
      %s31 = sadd.s32 1, %s26
      %p32 = scmp.ge.s32.totalorder %s31, 1
      %s33 = scalar_select %p32, 0, %s31
      %s34 = sadd.s32 1, %s25
      %s35 = scalar_select %p32, %s34, %s25
      %p36 = scmp.ge.s32.totalorder %s35, 2
      %s37 = scalar_select %p36, 0, %s35
      %s38 = ssub.s32 %s25, %s37
      %s39 = ssub.s32 %s26, %s33
      %s40 = sor.u32 %s38, %s39
      %p41 = scmp.eq.s32.totalorder %s40, 0
      %s43 = sadd.s32 %s42, 1
      %s44 = scalar_select %p41, %s42, %s43
      %p47 = pneg %p41
      %p48 = scmp.eq.s32.totalorder %s18, 1
      %p49 = por %p47, %p48
      %p50 = scmp.ne.s32.totalorder %s42, %s45
      %p51 = scmp.eq.s32.totalorder %s18, 0
      %p52 = por %p50, %p51
      %p53 = scmp.ne.s32.totalorder %s42, %s45
      %p54 = scmp.eq.s32.totalorder %s23, 1
      %p55 = por %p53, %p54
      %p56 = scmp.ne.s32.totalorder %s45, %s46
      %p57 = scmp.eq.s32.totalorder %s23, 0
      %p58 = por %p56, %p57
      %p59 = scmp.ne.s32.totalorder %s45, %s46
      %p60 = scmp.eq.s32.totalorder %s24, 1
      %p61 = por %p59, %p60
      %p63 = scmp.ne.s32.totalorder %s46, %s62
      %p64 = scmp.eq.s32.totalorder %s24, 0
      %p65 = por %p63, %p64
      %s67 = sadd.s32 %s66, 1
      %p70 = scmp.eq.s32.totalorder %s18, 1
      %p71 = scmp.ne.s32.totalorder %s66, %s68
      %p72 = scmp.eq.s32.totalorder %s18, 0
      %p73 = por %p71, %p72
      %p74 = scmp.ne.s32.totalorder %s66, %s68
      %p75 = scmp.eq.s32.totalorder %s23, 1
      %p76 = por %p74, %p75
      %p77 = scmp.ne.s32.totalorder %s68, %s69
      %p78 = scmp.eq.s32.totalorder %s23, 0
      %p79 = por %p77, %p78
      %p80 = scmp.ne.s32.totalorder %s68, %s69
      %p81 = scmp.eq.s32.totalorder %s24, 1
      %p82 = por %p80, %p81
      %p84 = scmp.ne.s32.totalorder %s69, %s83
      %p85 = scmp.eq.s32.totalorder %s24, 0
      %p86 = por %p84, %p85
      %s87 = ssub.s32 %s25, %s37
      %p88 = scmp.eq.s32.totalorder %s87, 0
      %s90 = sadd.s32 %s89, 1
      %s91 = scalar_select %p88, %s89, %s90
      %p94 = pneg %p88
      %p95 = scmp.eq.s32.totalorder %s18, 1
      %p96 = por %p94, %p95
      %p97 = scmp.ne.s32.totalorder %s89, %s92
      %p98 = scmp.eq.s32.totalorder %s18, 0
      %p99 = por %p97, %p98
      %p100 = scmp.ne.s32.totalorder %s89, %s92
      %p101 = scmp.eq.s32.totalorder %s23, 1
      %p102 = por %p100, %p101
      %p103 = scmp.ne.s32.totalorder %s92, %s93
      %p104 = scmp.eq.s32.totalorder %s23, 0
      %p105 = por %p103, %p104
      %p106 = scmp.ne.s32.totalorder %s92, %s93
      %p107 = scmp.eq.s32.totalorder %s24, 1
      %p108 = por %p106, %p107
      %p110 = scmp.ne.s32.totalorder %s93, %s109
      %p111 = scmp.eq.s32.totalorder %s24, 0
      %p112 = por %p110, %p111
      %s114 = sadd.s32 %s113, 1
      %p117 = scmp.eq.s32.totalorder %s18, 1
      %p118 = scmp.ne.s32.totalorder %s113, %s115
      %p119 = scmp.eq.s32.totalorder %s18, 0
      %p120 = por %p118, %p119
      %p121 = scmp.ne.s32.totalorder %s113, %s115
      %p122 = scmp.eq.s32.totalorder %s23, 1
      %p123 = por %p121, %p122
      %p124 = scmp.ne.s32.totalorder %s115, %s116
      %p125 = scmp.eq.s32.totalorder %s23, 0
      %p126 = por %p124, %p125
      %p127 = scmp.ne.s32.totalorder %s115, %s116
      %p128 = scmp.eq.s32.totalorder %s24, 1
      %p129 = por %p127, %p128
      %p131 = scmp.ne.s32.totalorder %s116, %s130
      %p132 = scmp.eq.s32.totalorder %s24, 0
      %p133 = por %p131, %p132
      %s135 = sadd.s32 %s134, 1
      %p138 = scmp.eq.s32.totalorder %s18, 1
      %p139 = scmp.ne.s32.totalorder %s134, %s136
      %p140 = scmp.eq.s32.totalorder %s18, 0
      %p141 = por %p139, %p140
      %p142 = scmp.ne.s32.totalorder %s134, %s136
      %p143 = scmp.eq.s32.totalorder %s23, 1
      %p144 = por %p142, %p143
      %p145 = scmp.ne.s32.totalorder %s136, %s137
      %p146 = scmp.eq.s32.totalorder %s23, 0
      %p147 = por %p145, %p146
      %p148 = scmp.ne.s32.totalorder %s136, %s137
      %p149 = scmp.eq.s32.totalorder %s24, 1
      %p150 = por %p148, %p149
      %p152 = scmp.ne.s32.totalorder %s137, %s151
      %p153 = scmp.eq.s32.totalorder %s24, 0
      %p154 = por %p152, %p153
      %s155 = ssub.s32 %s25, %s37
      %p156 = scmp.eq.s32.totalorder %s155, 0
      %s158 = sadd.s32 %s157, 1
      %s159 = scalar_select %p156, %s157, %s158
      %p162 = pneg %p156
      %p163 = scmp.eq.s32.totalorder %s18, 1
      %p164 = por %p162, %p163
      %p165 = scmp.ne.s32.totalorder %s157, %s160
      %p166 = scmp.eq.s32.totalorder %s18, 0
      %p167 = por %p165, %p166
      %p168 = scmp.ne.s32.totalorder %s157, %s160
      %p169 = scmp.eq.s32.totalorder %s23, 1
      %p170 = por %p168, %p169
      %p171 = scmp.ne.s32.totalorder %s160, %s161
      %p172 = scmp.eq.s32.totalorder %s23, 0
      %p173 = por %p171, %p172
      %p174 = scmp.ne.s32.totalorder %s160, %s161
      %p175 = scmp.eq.s32.totalorder %s24, 1
      %p176 = por %p174, %p175
      %p178 = scmp.ne.s32.totalorder %s161, %s177
      %p179 = scmp.eq.s32.totalorder %s24, 0
      %p180 = por %p178, %p179
      %s181 = ssub.s32 %s25, %s37
      %p182 = scmp.eq.s32.totalorder %s181, 0
      %s184 = sadd.s32 %s183, 1
      %s185 = scalar_select %p182, %s183, %s184
      %p188 = pneg %p182
      %p189 = scmp.eq.s32.totalorder %s18, 1
      %p190 = por %p188, %p189
      %p191 = scmp.ne.s32.totalorder %s183, %s186
      %p192 = scmp.eq.s32.totalorder %s18, 0
      %p193 = por %p191, %p192
      %p194 = scmp.ne.s32.totalorder %s183, %s186
      %p195 = scmp.eq.s32.totalorder %s23, 1
      %p196 = por %p194, %p195
      %p197 = scmp.ne.s32.totalorder %s186, %s187
      %p198 = scmp.eq.s32.totalorder %s23, 0
      %p199 = por %p197, %p198
      %p200 = scmp.ne.s32.totalorder %s186, %s187
      %p201 = scmp.eq.s32.totalorder %s24, 1
      %p202 = por %p200, %p201
      %p204 = scmp.ne.s32.totalorder %s187, %s203
      %p205 = scmp.eq.s32.totalorder %s24, 0
      %p206 = por %p204, %p205
      %p207 = scmp.le.s32.totalorder 1, %s18
      %p208 = scmp.lt.s32.totalorder %s18, 3
      %p209 = pnand %p207, %p208
      %p210 = pneg %p209
      // Predicated region
      $region9: #{tpu_custom_call.1} parent=5 // pred_check
        _
      $region10: #{tpu_custom_call.1} parent=5 // pred_check_branch
        %212 = sbr.rel (%p209) target = $region12
      $region11: #{tpu_custom_call.1} parent=5 // pred_region
        %s213 = ssub.s32 %s18, 1
        // Predicated region
        $region13: #{tpu_custom_call.1} parent=11 // pred_check
          %p214 = pneg %p79
        $region14: #{tpu_custom_call.1} parent=11 // pred_check_branch
          %216 = sbr.rel (%p214) target = $region16
        $region15: #{tpu_custom_call.1} parent=11 // pred_region
          _
        $region16: #{tpu_custom_call.1} parent=11 // pred_fallthru
          _
        // Predicated region
        $region17: #{tpu_custom_call.1} parent=11 // pred_check
          %p217 = pneg %p126
        $region18: #{tpu_custom_call.1} parent=11 // pred_check_branch
          %219 = sbr.rel (%p217) target = $region20
        $region19: #{tpu_custom_call.1} parent=11 // pred_region
          _
        $region20: #{tpu_custom_call.1} parent=11 // pred_fallthru
          _
        // Predicated region
        $region21: #{tpu_custom_call.1} parent=11 // pred_check
          %p220 = pneg %p147
        $region22: #{tpu_custom_call.1} parent=11 // pred_check_branch
          %222 = sbr.rel (%p220) target = $region24
        $region23: #{tpu_custom_call.1} parent=11 // pred_region
          _
        $region24: #{tpu_custom_call.1} parent=11 // pred_fallthru
          _
      $region12: #{tpu_custom_call.1} parent=5 // pred_fallthru
        _
      %p223 = scmp.lt.s32.totalorder %s18, 2
      // Predicated region
      $region25: #{tpu_custom_call.1} parent=5 // pred_check
        %p224 = pneg %p223
      $region26: #{tpu_custom_call.1} parent=5 // pred_check_branch
        %226 = sbr.rel (%p224) target = $region28
      $region27: #{tpu_custom_call.1} parent=5 // pred_region
        // Predicated region
        $region29: #{tpu_custom_call.1} parent=27 // pred_check
          %p227 = pneg %p52
        $region30: #{tpu_custom_call.1} parent=27 // pred_check_branch
          %229 = sbr.rel (%p227) target = $region32
        $region31: #{tpu_custom_call.1} parent=27 // pred_region
          %s230 = sand.u32 %s42, 1
          %s231 = scalar_lea.sflag [#allocation4], %s230
          %s232 = sand.u32 %s42, 1
          %s233 = smul.addr %s232, 64
          %s234 = scalar_lea.vmem [#allocation3], %s233
          %s235 = smul.u32 4, %s25
          %s236 = smul.u32 2, %s26
          %238 = vsyncadd %s231, 0
          %s239 = smul.addr %s235, 2
          %s240 = sadd.s32 %s236, %s239
          %s241 = smul.addr %s240, 8
          %s242 = scalar_lea.hbm %s0, %s241
          %s243 = sshll.u32 %s242, 4
          %s244 = int_to_ptr.hbm [resolvable:$true] %s243
          %s245 = sshll.u32 %s234, 4
          %s246 = int_to_ptr.vmem [resolvable:$true] %s245
          %251 = dma.hbm_to_vmem [thread:$0]  %s244, 1024, %s246, %s231, 256, 256, 16
        $region32: #{tpu_custom_call.1} parent=27 // pred_fallthru
          _
        // Predicated region
        $region33: #{tpu_custom_call.1} parent=27 // pred_check
          %p252 = pneg %p99
        $region34: #{tpu_custom_call.1} parent=27 // pred_check_branch
          %254 = sbr.rel (%p252) target = $region36
        $region35: #{tpu_custom_call.1} parent=27 // pred_region
          %s255 = smul.u32 16, %s25
          %p256 = scmp.lt.s32.totalorder %s255, 31
          %s257 = scalar_select %p256, %s255, 31
          %s258 = smul.addr %s257, 4
          %s259 = scalar_lea.vmem %s2, %s258
          %s260 = smul.u32 16, %s25
        $region36: #{tpu_custom_call.1} parent=27 // pred_fallthru
          _
        // Predicated region
        $region37: #{tpu_custom_call.1} parent=27 // pred_check
          %p261 = pneg %p167
        $region38: #{tpu_custom_call.1} parent=27 // pred_check_branch
          %263 = sbr.rel (%p261) target = $region40
        $region39: #{tpu_custom_call.1} parent=27 // pred_region
          %s264 = smul.u32 16, %s25
          %p265 = scmp.lt.s32.totalorder %s264, 31
          %s266 = scalar_select %p265, %s264, 31
          %s267 = smul.addr %s266, 8
          %s268 = scalar_lea.vmem %s5, %s267
          %s269 = smul.u32 16, %s25
        $region40: #{tpu_custom_call.1} parent=27 // pred_fallthru
          _
      $region28: #{tpu_custom_call.1} parent=5 // pred_fallthru
        _
      %p270 = scmp.le.s32.totalorder 1, %s18
      %p271 = scmp.lt.s32.totalorder %s18, 3
      %p272 = pnand %p270, %p271
      %p273 = pneg %p272
      // Predicated region
      $region41: #{tpu_custom_call.1} parent=5 // pred_check
        _
      $region42: #{tpu_custom_call.1} parent=5 // pred_check_branch
        %275 = sbr.rel (%p272) target = $region44
      $region43: #{tpu_custom_call.1} parent=5 // pred_region
        %s276 = ssub.s32 %s18, 1
        %s277 = sand.u32 %s45, 1
        %s278 = scalar_lea.sflag [#allocation4], %s277
        %s279 = sand.u32 %s45, 1
        %s280 = smul.addr %s279, 64
        %s281 = scalar_lea.vmem [#allocation3], %s280
        // Predicated region
        $region45: #{tpu_custom_call.1} parent=43 // pred_check
          %p282 = pneg %p58
        $region46: #{tpu_custom_call.1} parent=43 // pred_check_branch
          %284 = sbr.rel (%p282) target = $region48
        $region47: #{tpu_custom_call.1} parent=43 // pred_region
          %286 = dma.done %s278, 1024
        $region48: #{tpu_custom_call.1} parent=43 // pred_fallthru
          _
        %s287 = sand.u32 %s45, 1
        %s288 = scalar_lea.sflag [#allocation4], %s287
        %s289 = sand.u32 %s45, 1
        %s290 = smul.addr %s289, 64
        %s291 = scalar_lea.vmem [#allocation3], %s290
        %p292 = pneg %p58
        %p293 = pneg %p55
        %p294 = pneg %p79
        %p295 = pneg %p76
        %s296 = smul.u32 16, %s27
        %p297 = scmp.lt.s32.totalorder %s296, 31
        %s298 = scalar_select %p297, %s296, 31
        %s299 = smul.addr %s298, 4
        %s300 = scalar_lea.vmem %s2, %s299
        %p301 = pneg %p105
        %p302 = pneg %p102
        %p303 = pneg %p126
        %p304 = pneg %p123
        %p305 = pneg %p147
        %p306 = pneg %p144
        %s307 = smul.u32 16, %s27
        %p308 = scmp.lt.s32.totalorder %s307, 31
        %s309 = scalar_select %p308, %s307, 31
        %s310 = smul.addr %s309, 8
        %s311 = scalar_lea.vmem %s5, %s310
        %p312 = pneg %p173
        %p313 = pneg %p170
        %p314 = pneg %p199
        %p315 = pneg %p196
        %s316 = sand.u32 %s186, 1
        %s317 = scalar_lea.sflag [#allocation5], %s316
        %s318 = sand.u32 %s186, 1
        %s319 = smul.addr %s318, 128
        %s320 = scalar_lea.vmem [#allocation6], %s319
        %s321 = smul.u32 4, %s27
        %s322 = smul.u32 2, %s28
        %s323 = smul.u32 16, %s27
        %p324 = scmp.lt.s32.totalorder %s323, 31
        %s325 = scalar_select %p324, %s323, 31
        %s326 = smul.addr %s325, 4
        %s327 = scalar_lea.vmem %s2, %s326
        %s328 = smul.u32 16, %s27
        %s329 = smul.u32 16, %s27
        %p330 = scmp.lt.s32.totalorder %s329, 31
        %s331 = scalar_select %p330, %s329, 31
        %s332 = smul.addr %s331, 8
        %s333 = scalar_lea.vmem %s5, %s332
        %s334 = smul.u32 16, %s27
        %s335 = smul.u32 16, %s27
        %p337 = scmp.eq.s32.totalorder %s28, 0
        // Predicated region
        $region49: #{tpu_custom_call.1} parent=43 // pred_check
          %p338 = pneg %p337
        $region50: #{tpu_custom_call.1} parent=43 // pred_check_branch
          %340 = sbr.rel (%p338) target = $region52
        $region51: #{tpu_custom_call.1} parent=43 // pred_region
          %vm341 = vcmask 523264
          %342 = vst.msk [vmem:[#allocation2] sm:$0xff] %vm341, 0.0
          %343 = vst.msk [vmem:[#allocation2 + $0x8] sm:$0xff] %vm341, 0.0
          %344 = vst.msk [vmem:[#allocation2 + $0x10] sm:$0xff] %vm341, 0.0
          %345 = vst.msk [vmem:[#allocation2 + $0x18] sm:$0xff] %vm341, 0.0
          %346 = vst.msk [vmem:[#allocation2 + $0x20] sm:$0xff] %vm341, 0.0
          %347 = vst.msk [vmem:[#allocation2 + $0x28] sm:$0xff] %vm341, 0.0
          %348 = vst.msk [vmem:[#allocation2 + $0x30] sm:$0xff] %vm341, 0.0
          %349 = vst.msk [vmem:[#allocation2 + $0x38] sm:$0xff] %vm341, 0.0
          %350 = vst.msk [vmem:[#allocation2 + $0x40] sm:$0xff] %vm341, 0.0
          %351 = vst.msk [vmem:[#allocation2 + $0x48] sm:$0xff] %vm341, 0.0
          %352 = vst.msk [vmem:[#allocation2 + $0x50] sm:$0xff] %vm341, 0.0
          %353 = vst.msk [vmem:[#allocation2 + $0x58] sm:$0xff] %vm341, 0.0
          %354 = vst.msk [vmem:[#allocation2 + $0x60] sm:$0xff] %vm341, 0.0
          %355 = vst.msk [vmem:[#allocation2 + $0x68] sm:$0xff] %vm341, 0.0
          %356 = vst.msk [vmem:[#allocation2 + $0x70] sm:$0xff] %vm341, 0.0
          %357 = vst.msk [vmem:[#allocation2 + $0x78] sm:$0xff] %vm341, 0.0
        $region52: #{tpu_custom_call.1} parent=43 // pred_fallthru
          _
        %s358 = smul.u32 %s28, 256
        %s359 = sshra.s32 %s358, 3
        %s360 = sand.u32 %s358, 7
        %s361 = smul.addr %s359, 4
        %s362 = scalar_lea.vmem %s1, %s361
        %v363 = vld [vmem:[%s362] sm:$0xf]
        %v364 = vld [vmem:[%s362 + $0x4] sm:$0xf]
        %v365 = vld [vmem:[%s362 + $0x8] sm:$0xf]
        %v366 = vld [vmem:[%s362 + $0xc] sm:$0xf]
        %v367 = vld [vmem:[%s362 + $0x10] sm:$0xf]
        %v368 = vld [vmem:[%s362 + $0x14] sm:$0xf]
        %v369 = vld [vmem:[%s362 + $0x18] sm:$0xf]
        %v370 = vld [vmem:[%s362 + $0x1c] sm:$0xf]
        %v371 = vld [vmem:[%s362 + $0x20] sm:$0xf]
        %v372 = vld [vmem:[%s362 + $0x24] sm:$0xf]
        %v373 = vld [vmem:[%s362 + $0x28] sm:$0xf]
        %v374 = vld [vmem:[%s362 + $0x2c] sm:$0xf]
        %v375 = vld [vmem:[%s362 + $0x30] sm:$0xf]
        %v376 = vld [vmem:[%s362 + $0x34] sm:$0xf]
        %v377 = vld [vmem:[%s362 + $0x38] sm:$0xf]
        %v378 = vld [vmem:[%s362 + $0x3c] sm:$0xf]
        %v379 = vld [vmem:[%s362 + $0x40] sm:$0xf]
        %v380 = vld [vmem:[%s362 + $0x44] sm:$0xf]
        %v381 = vld [vmem:[%s362 + $0x48] sm:$0xf]
        %v382 = vld [vmem:[%s362 + $0x4c] sm:$0xf]
        %v383 = vld [vmem:[%s362 + $0x50] sm:$0xf]
        %v384 = vld [vmem:[%s362 + $0x54] sm:$0xf]
        %v385 = vld [vmem:[%s362 + $0x58] sm:$0xf]
        %v386 = vld [vmem:[%s362 + $0x5c] sm:$0xf]
        %v387 = vld [vmem:[%s362 + $0x60] sm:$0xf]
        %v388 = vld [vmem:[%s362 + $0x64] sm:$0xf]
        %v389 = vld [vmem:[%s362 + $0x68] sm:$0xf]
        %v390 = vld [vmem:[%s362 + $0x6c] sm:$0xf]
        %v391 = vld [vmem:[%s362 + $0x70] sm:$0xf]
        %v392 = vld [vmem:[%s362 + $0x74] sm:$0xf]
        %v393 = vld [vmem:[%s362 + $0x78] sm:$0xf]
        %v394 = vld [vmem:[%s362 + $0x7c] sm:$0xf]
        %v395 = vld [vmem:[#allocation2] sm:$0xff]
        %v396 = vld [vmem:[#allocation2 + $0x8] sm:$0xff]
        %v397 = vld [vmem:[#allocation2 + $0x10] sm:$0xff]
        %v398 = vld [vmem:[#allocation2 + $0x18] sm:$0xff]
        %v399 = vld [vmem:[#allocation2 + $0x20] sm:$0xff]
        %v400 = vld [vmem:[#allocation2 + $0x28] sm:$0xff]
        %v401 = vld [vmem:[#allocation2 + $0x30] sm:$0xff]
        %v402 = vld [vmem:[#allocation2 + $0x38] sm:$0xff]
        %v403 = vld [vmem:[#allocation2 + $0x40] sm:$0xff]
        %v404 = vld [vmem:[#allocation2 + $0x48] sm:$0xff]
        %v405 = vld [vmem:[#allocation2 + $0x50] sm:$0xff]
        %v406 = vld [vmem:[#allocation2 + $0x58] sm:$0xff]
        %v407 = vld [vmem:[#allocation2 + $0x60] sm:$0xff]
        %v408 = vld [vmem:[#allocation2 + $0x68] sm:$0xff]
        %v409 = vld [vmem:[#allocation2 + $0x70] sm:$0xff]
        %v410 = vld [vmem:[#allocation2 + $0x78] sm:$0xff]
        %v411 = vld [vmem:[%s281] sm:$0xff]
        %v412 = vld [vmem:[%s281 + $0x8] sm:$0xff]
        %v413 = vld [vmem:[%s281 + $0x10] sm:$0xff]
        %v414 = vld [vmem:[%s281 + $0x18] sm:$0xff]
        %v415 = vld [vmem:[%s281 + $0x20] sm:$0xff]
        %v416 = vld [vmem:[%s281 + $0x28] sm:$0xff]
        %v417 = vld [vmem:[%s281 + $0x30] sm:$0xff]
        %v418 = vld [vmem:[%s281 + $0x38] sm:$0xff]
        %v419 = vunpack.c.0.s8 %v411
        %v420 = vunpack.c.0.s8 %v412
        %v421 = vunpack.c.1.s8 %v411
        %v422 = vunpack.c.1.s8 %v412
        %v423 = vunpack.c.2.s8 %v411
        %v424 = vunpack.c.2.s8 %v412
        %v425 = vunpack.c.3.s8 %v411
        %v426 = vunpack.c.3.s8 %v412
        %v427 = vunpack.c.0.s8 %v413
        %v428 = vunpack.c.0.s8 %v414
        %v429 = vunpack.c.1.s8 %v413
        %v430 = vunpack.c.1.s8 %v414
        %v431 = vunpack.c.2.s8 %v413
        %v432 = vunpack.c.2.s8 %v414
        %v433 = vunpack.c.3.s8 %v413
        %v434 = vunpack.c.3.s8 %v414
        %v435 = vunpack.c.0.s8 %v415
        %v436 = vunpack.c.0.s8 %v416
        %v437 = vunpack.c.1.s8 %v415
        %v438 = vunpack.c.1.s8 %v416
        %v439 = vunpack.c.2.s8 %v415
        %v440 = vunpack.c.2.s8 %v416
        %v441 = vunpack.c.3.s8 %v415
        %v442 = vunpack.c.3.s8 %v416
        %v443 = vunpack.c.0.s8 %v417
        %v444 = vunpack.c.0.s8 %v418
        %v445 = vunpack.c.1.s8 %v417
        %v446 = vunpack.c.1.s8 %v418
        %v447 = vunpack.c.2.s8 %v417
        %v448 = vunpack.c.2.s8 %v418
        %v449 = vunpack.c.3.s8 %v417
        %v450 = vunpack.c.3.s8 %v418
        %v451 = vcvt.s32.f32 %v419
        %v452 = vcvt.s32.f32 %v420
        %v453 = vcvt.s32.f32 %v421
        %v454 = vcvt.s32.f32 %v422
        %v455 = vcvt.s32.f32 %v423
        %v456 = vcvt.s32.f32 %v424
        %v457 = vcvt.s32.f32 %v425
        %v458 = vcvt.s32.f32 %v426
        %v459 = vcvt.s32.f32 %v427
        %v460 = vcvt.s32.f32 %v428
        %v461 = vcvt.s32.f32 %v429
        %v462 = vcvt.s32.f32 %v430
        %v463 = vcvt.s32.f32 %v431
        %v464 = vcvt.s32.f32 %v432
        %v465 = vcvt.s32.f32 %v433
        %v466 = vcvt.s32.f32 %v434
        %v467 = vcvt.s32.f32 %v435
        %v468 = vcvt.s32.f32 %v436
        %v469 = vcvt.s32.f32 %v437
        %v470 = vcvt.s32.f32 %v438
        %v471 = vcvt.s32.f32 %v439
        %v472 = vcvt.s32.f32 %v440
        %v473 = vcvt.s32.f32 %v441
        %v474 = vcvt.s32.f32 %v442
        %v475 = vcvt.s32.f32 %v443
        %v476 = vcvt.s32.f32 %v444
        %v477 = vcvt.s32.f32 %v445
        %v478 = vcvt.s32.f32 %v446
        %v479 = vcvt.s32.f32 %v447
        %v480 = vcvt.s32.f32 %v448
        %v481 = vcvt.s32.f32 %v449
        %v482 = vcvt.s32.f32 %v450
        %v483 = vpack.c.bf16 %v453, %v451
        %v484 = vpack.c.bf16 %v454, %v452
        %v485 = vpack.c.bf16 %v457, %v455
        %v486 = vpack.c.bf16 %v458, %v456
        %v487 = vpack.c.bf16 %v461, %v459
        %v488 = vpack.c.bf16 %v462, %v460
        %v489 = vpack.c.bf16 %v465, %v463
        %v490 = vpack.c.bf16 %v466, %v464
        %v491 = vpack.c.bf16 %v469, %v467
        %v492 = vpack.c.bf16 %v470, %v468
        %v493 = vpack.c.bf16 %v473, %v471
        %v494 = vpack.c.bf16 %v474, %v472
        %v495 = vpack.c.bf16 %v477, %v475
        %v496 = vpack.c.bf16 %v478, %v476
        %v497 = vpack.c.bf16 %v481, %v479
        %v498 = vpack.c.bf16 %v482, %v480
        %v531 = vunpack.c.l.b16 %v363
        %v532 = vunpack.c.l.b16 %v364
        %v533 = vunpack.c.l.b16 %v365
        %v534 = vunpack.c.l.b16 %v366
        %v535 = vunpack.c.l.b16 %v367
        %v536 = vunpack.c.l.b16 %v368
        %v537 = vunpack.c.l.b16 %v369
        %v538 = vunpack.c.l.b16 %v370
        %v539 = vunpack.c.l.b16 %v371
        %v540 = vunpack.c.l.b16 %v372
        %v541 = vunpack.c.l.b16 %v373
        %v542 = vunpack.c.l.b16 %v374
        %v543 = vunpack.c.l.b16 %v375
        %v544 = vunpack.c.l.b16 %v376
        %v545 = vunpack.c.l.b16 %v377
        %v546 = vunpack.c.l.b16 %v378
        %v547 = vunpack.c.l.b16 %v379
        %v548 = vunpack.c.l.b16 %v380
        %v549 = vunpack.c.l.b16 %v381
        %v550 = vunpack.c.l.b16 %v382
        %v551 = vunpack.c.l.b16 %v383
        %v552 = vunpack.c.l.b16 %v384
        %v553 = vunpack.c.l.b16 %v385
        %v554 = vunpack.c.l.b16 %v386
        %v555 = vunpack.c.l.b16 %v387
        %v556 = vunpack.c.l.b16 %v388
        %v557 = vunpack.c.l.b16 %v389
        %v558 = vunpack.c.l.b16 %v390
        %v559 = vunpack.c.l.b16 %v391
        %v560 = vunpack.c.l.b16 %v392
        %v561 = vunpack.c.l.b16 %v393
        %v562 = vunpack.c.l.b16 %v394
        %v563 = vpack.c.b16 %v532, %v531
        %v564 = vpack.c.b16 %v534, %v533
        %v565 = vpack.c.b16 %v536, %v535
        %v566 = vpack.c.b16 %v538, %v537
        %v567 = vpack.c.b16 %v540, %v539
        %v568 = vpack.c.b16 %v542, %v541
        %v569 = vpack.c.b16 %v544, %v543
        %v570 = vpack.c.b16 %v546, %v545
        %v571 = vpack.c.b16 %v548, %v547
        %v572 = vpack.c.b16 %v550, %v549
        %v573 = vpack.c.b16 %v552, %v551
        %v574 = vpack.c.b16 %v554, %v553
        %v575 = vpack.c.b16 %v556, %v555
        %v576 = vpack.c.b16 %v558, %v557
        %v577 = vpack.c.b16 %v560, %v559
        %v578 = vpack.c.b16 %v562, %v561
        %595 = vmatpush.bf16.msra.mxu0 %v570
        %596 = vmatpush.bf16.msra.mxu0 %v569
        %597 = vmatpush.bf16.msra.mxu0 %v568
        %598 = vmatpush.bf16.msra.mxu0 %v567
        %599 = vmatpush.bf16.msra.mxu0 %v566
        %600 = vmatpush.bf16.msra.mxu0 %v565
        %601 = vmatpush.bf16.msra.mxu0 %v564
        %602 = vmatpush.bf16.msra.mxu0 %v563
        %603 = vmatmul.bf16.gmra.mxu0 %v483
        %v604 = vpop.f32.mrf.mxu0
        %v605 = vadd.f32 0.0, %v604
        %v606 = vpop.f32.mrf.mxu0
        %v607 = vadd.f32 0.0, %v606
        %608 = vmatmul.bf16.gmra.mxu0 %v485
        %v609 = vpop.f32.mrf.mxu0
        %v610 = vadd.f32 0.0, %v609
        %v611 = vpop.f32.mrf.mxu0
        %v612 = vadd.f32 0.0, %v611
        %613 = vmatmul.bf16.gmra.mxu0 %v487
        %v614 = vpop.f32.mrf.mxu0
        %v615 = vadd.f32 0.0, %v614
        %v616 = vpop.f32.mrf.mxu0
        %v617 = vadd.f32 0.0, %v616
        %618 = vmatmul.bf16.gmra.mxu0 %v489
        %v619 = vpop.f32.mrf.mxu0
        %v620 = vadd.f32 0.0, %v619
        %v621 = vpop.f32.mrf.mxu0
        %v622 = vadd.f32 0.0, %v621
        %623 = vmatmul.bf16.gmra.mxu0 %v491
        %v624 = vpop.f32.mrf.mxu0
        %v625 = vadd.f32 0.0, %v624
        %v626 = vpop.f32.mrf.mxu0
        %v627 = vadd.f32 0.0, %v626
        %628 = vmatmul.bf16.gmra.mxu0 %v493
        %v629 = vpop.f32.mrf.mxu0
        %v630 = vadd.f32 0.0, %v629
        %v631 = vpop.f32.mrf.mxu0
        %v632 = vadd.f32 0.0, %v631
        %633 = vmatmul.bf16.gmra.mxu0 %v495
        %v634 = vpop.f32.mrf.mxu0
        %v635 = vadd.f32 0.0, %v634
        %v636 = vpop.f32.mrf.mxu0
        %v637 = vadd.f32 0.0, %v636
        %638 = vmatmul.bf16.gmra.mxu0 %v497
        %v639 = vpop.f32.mrf.mxu0
        %v640 = vadd.f32 0.0, %v639
        %v641 = vpop.f32.mrf.mxu0
        %v642 = vadd.f32 0.0, %v641
        %643 = vdwg.mxu0
        %644 = vmatpush.bf16.msra.mxu0 %v578
        %645 = vmatpush.bf16.msra.mxu0 %v577
        %646 = vmatpush.bf16.msra.mxu0 %v576
        %647 = vmatpush.bf16.msra.mxu0 %v575
        %648 = vmatpush.bf16.msra.mxu0 %v574
        %649 = vmatpush.bf16.msra.mxu0 %v573
        %650 = vmatpush.bf16.msra.mxu0 %v572
        %651 = vmatpush.bf16.msra.mxu0 %v571
        %652 = vmatmul.bf16.gmra.mxu0 %v484
        %v653 = vpop.f32.mrf.mxu0
        %v654 = vadd.f32 %v605, %v653
        %v655 = vpop.f32.mrf.mxu0
        %v656 = vadd.f32 %v607, %v655
        %657 = vmatmul.bf16.gmra.mxu0 %v486
        %v658 = vpop.f32.mrf.mxu0
        %v659 = vadd.f32 %v610, %v658
        %v660 = vpop.f32.mrf.mxu0
        %v661 = vadd.f32 %v612, %v660
        %662 = vmatmul.bf16.gmra.mxu0 %v488
        %v663 = vpop.f32.mrf.mxu0
        %v664 = vadd.f32 %v615, %v663
        %v665 = vpop.f32.mrf.mxu0
        %v666 = vadd.f32 %v617, %v665
        %667 = vmatmul.bf16.gmra.mxu0 %v490
        %v668 = vpop.f32.mrf.mxu0
        %v669 = vadd.f32 %v620, %v668
        %v670 = vpop.f32.mrf.mxu0
        %v671 = vadd.f32 %v622, %v670
        %672 = vmatmul.bf16.gmra.mxu0 %v492
        %v673 = vpop.f32.mrf.mxu0
        %v674 = vadd.f32 %v625, %v673
        %v675 = vpop.f32.mrf.mxu0
        %v676 = vadd.f32 %v627, %v675
        %677 = vmatmul.bf16.gmra.mxu0 %v494
        %v678 = vpop.f32.mrf.mxu0
        %v679 = vadd.f32 %v630, %v678
        %v680 = vpop.f32.mrf.mxu0
        %v681 = vadd.f32 %v632, %v680
        %682 = vmatmul.bf16.gmra.mxu0 %v496
        %v683 = vpop.f32.mrf.mxu0
        %v684 = vadd.f32 %v635, %v683
        %v685 = vpop.f32.mrf.mxu0
        %v686 = vadd.f32 %v637, %v685
        %687 = vmatmul.bf16.gmra.mxu0 %v498
        %v688 = vpop.f32.mrf.mxu0
        %v689 = vadd.f32 %v640, %v688
        %v690 = vpop.f32.mrf.mxu0
        %v691 = vadd.f32 %v642, %v690
        %692 = vdwg.mxu0
        %v693 = vadd.f32 %v395, %v654
        %v694 = vadd.f32 %v396, %v656
        %v695 = vadd.f32 %v397, %v659
        %v696 = vadd.f32 %v398, %v661
        %v697 = vadd.f32 %v399, %v664
        %v698 = vadd.f32 %v400, %v666
        %v699 = vadd.f32 %v401, %v669
        %v700 = vadd.f32 %v402, %v671
        %v701 = vadd.f32 %v403, %v674
        %v702 = vadd.f32 %v404, %v676
        %v703 = vadd.f32 %v405, %v679
        %v704 = vadd.f32 %v406, %v681
        %v705 = vadd.f32 %v407, %v684
        %v706 = vadd.f32 %v408, %v686
        %v707 = vadd.f32 %v409, %v689
        %v708 = vadd.f32 %v410, %v691
        %vm709 = vcmask 523264
        %710 = vst.msk [vmem:[#allocation2] sm:$0xff] %vm709, %v693
        %711 = vst.msk [vmem:[#allocation2 + $0x8] sm:$0xff] %vm709, %v694
        %712 = vst.msk [vmem:[#allocation2 + $0x10] sm:$0xff] %vm709, %v695
        %713 = vst.msk [vmem:[#allocation2 + $0x18] sm:$0xff] %vm709, %v696
        %714 = vst.msk [vmem:[#allocation2 + $0x20] sm:$0xff] %vm709, %v697
        %715 = vst.msk [vmem:[#allocation2 + $0x28] sm:$0xff] %vm709, %v698
        %716 = vst.msk [vmem:[#allocation2 + $0x30] sm:$0xff] %vm709, %v699
        %717 = vst.msk [vmem:[#allocation2 + $0x38] sm:$0xff] %vm709, %v700
        %718 = vst.msk [vmem:[#allocation2 + $0x40] sm:$0xff] %vm709, %v701
        %719 = vst.msk [vmem:[#allocation2 + $0x48] sm:$0xff] %vm709, %v702
        %720 = vst.msk [vmem:[#allocation2 + $0x50] sm:$0xff] %vm709, %v703
        %721 = vst.msk [vmem:[#allocation2 + $0x58] sm:$0xff] %vm709, %v704
        %722 = vst.msk [vmem:[#allocation2 + $0x60] sm:$0xff] %vm709, %v705
        %723 = vst.msk [vmem:[#allocation2 + $0x68] sm:$0xff] %vm709, %v706
        %724 = vst.msk [vmem:[#allocation2 + $0x70] sm:$0xff] %vm709, %v707
        %725 = vst.msk [vmem:[#allocation2 + $0x78] sm:$0xff] %vm709, %v708
        // Predicated region
        $region53: #{tpu_custom_call.1} parent=43 // pred_check
          %p726 = pneg %p337
        $region54: #{tpu_custom_call.1} parent=43 // pred_check_branch
          %728 = sbr.rel (%p726) target = $region56
        $region55: #{tpu_custom_call.1} parent=43 // pred_region
          %v729 = vld [vmem:[#allocation2] sm:$0xff]
          %v730 = vld [vmem:[#allocation2 + $0x8] sm:$0xff]
          %v731 = vld [vmem:[#allocation2 + $0x10] sm:$0xff]
          %v732 = vld [vmem:[#allocation2 + $0x18] sm:$0xff]
          %v733 = vld [vmem:[#allocation2 + $0x20] sm:$0xff]
          %v734 = vld [vmem:[#allocation2 + $0x28] sm:$0xff]
          %v735 = vld [vmem:[#allocation2 + $0x30] sm:$0xff]
          %v736 = vld [vmem:[#allocation2 + $0x38] sm:$0xff]
          %v737 = vld [vmem:[#allocation2 + $0x40] sm:$0xff]
          %v738 = vld [vmem:[#allocation2 + $0x48] sm:$0xff]
          %v739 = vld [vmem:[#allocation2 + $0x50] sm:$0xff]
          %v740 = vld [vmem:[#allocation2 + $0x58] sm:$0xff]
          %v741 = vld [vmem:[#allocation2 + $0x60] sm:$0xff]
          %v742 = vld [vmem:[#allocation2 + $0x68] sm:$0xff]
          %v743 = vld [vmem:[#allocation2 + $0x70] sm:$0xff]
          %v744 = vld [vmem:[#allocation2 + $0x78] sm:$0xff]
          %v745 = vmul.f32 %v729, 0.00390625
          %v746 = vmul.f32 %v730, 0.00390625
          %v747 = vmul.f32 %v731, 0.00390625
          %v748 = vmul.f32 %v732, 0.00390625
          %v749 = vmul.f32 %v733, 0.00390625
          %v750 = vmul.f32 %v734, 0.00390625
          %v751 = vmul.f32 %v735, 0.00390625
          %v752 = vmul.f32 %v736, 0.00390625
          %v753 = vmul.f32 %v737, 0.00390625
          %v754 = vmul.f32 %v738, 0.00390625
          %v755 = vmul.f32 %v739, 0.00390625
          %v756 = vmul.f32 %v740, 0.00390625
          %v757 = vmul.f32 %v741, 0.00390625
          %v758 = vmul.f32 %v742, 0.00390625
          %v759 = vmul.f32 %v743, 0.00390625
          %v760 = vmul.f32 %v744, 0.00390625
          %v761 = vld [vmem:[%s327] sm:$0xf]
          %v762 = vld [vmem:[%s327 + $0x4] sm:$0xf]
          %v763 = vld [vmem:[%s327 + $0x8] sm:$0xf]
          %v764 = vld [vmem:[%s327 + $0xc] sm:$0xf]
          %v765 = vld [vmem:[%s327 + $0x10] sm:$0xf]
          %v766 = vld [vmem:[%s327 + $0x14] sm:$0xf]
          %v767 = vld [vmem:[%s327 + $0x18] sm:$0xf]
          %v768 = vld [vmem:[%s327 + $0x1c] sm:$0xf]
          %v769 = vld [vmem:[%s327 + $0x20] sm:$0xf]
          %v770 = vld [vmem:[%s327 + $0x24] sm:$0xf]
          %v771 = vld [vmem:[%s327 + $0x28] sm:$0xf]
          %v772 = vld [vmem:[%s327 + $0x2c] sm:$0xf]
          %v773 = vld [vmem:[%s327 + $0x30] sm:$0xf]
          %v774 = vld [vmem:[%s327 + $0x34] sm:$0xf]
          %v775 = vld [vmem:[%s327 + $0x38] sm:$0xf]
          %v776 = vld [vmem:[%s327 + $0x3c] sm:$0xf]
          %v777 = vunpack.c.l.bf16 %v761
          %v778 = vunpack.c.l.bf16 %v762
          %v779 = vunpack.c.l.bf16 %v763
          %v780 = vunpack.c.l.bf16 %v764
          %v781 = vunpack.c.l.bf16 %v765
          %v782 = vunpack.c.l.bf16 %v766
          %v783 = vunpack.c.l.bf16 %v767
          %v784 = vunpack.c.l.bf16 %v768
          %v785 = vunpack.c.l.bf16 %v769
          %v786 = vunpack.c.l.bf16 %v770
          %v787 = vunpack.c.l.bf16 %v771
          %v788 = vunpack.c.l.bf16 %v772
          %v789 = vunpack.c.l.bf16 %v773
          %v790 = vunpack.c.l.bf16 %v774
          %v791 = vunpack.c.l.bf16 %v775
          %v792 = vunpack.c.l.bf16 %v776
          %v793 = vmul.f32 %v745, %v777
          %v794 = vmul.f32 %v746, %v778
          %v795 = vmul.f32 %v747, %v779
          %v796 = vmul.f32 %v748, %v780
          %v797 = vmul.f32 %v749, %v781
          %v798 = vmul.f32 %v750, %v782
          %v799 = vmul.f32 %v751, %v783
          %v800 = vmul.f32 %v752, %v784
          %v801 = vmul.f32 %v753, %v785
          %v802 = vmul.f32 %v754, %v786
          %v803 = vmul.f32 %v755, %v787
          %v804 = vmul.f32 %v756, %v788
          %v805 = vmul.f32 %v757, %v789
          %v806 = vmul.f32 %v758, %v790
          %v807 = vmul.f32 %v759, %v791
          %v808 = vmul.f32 %v760, %v792
          %v809 = vpack.c.bf16 %v746, %v745
          %v810 = vpack.c.bf16 %v748, %v747
          %v811 = vpack.c.bf16 %v750, %v749
          %v812 = vpack.c.bf16 %v752, %v751
          %v813 = vpack.c.bf16 %v754, %v753
          %v814 = vpack.c.bf16 %v756, %v755
          %v815 = vpack.c.bf16 %v758, %v757
          %v816 = vpack.c.bf16 %v760, %v759
          %v817 = vld [vmem:[%s3] sm:$0xf]
          %v818 = vld [vmem:[%s3 + $0x4] sm:$0xf]
          %v819 = vld [vmem:[%s3 + $0x8] sm:$0xf]
          %v820 = vld [vmem:[%s3 + $0xc] sm:$0xf]
          %v821 = vld [vmem:[%s3 + $0x10] sm:$0xf]
          %v822 = vld [vmem:[%s3 + $0x14] sm:$0xf]
          %v823 = vld [vmem:[%s3 + $0x18] sm:$0xf]
          %v824 = vld [vmem:[%s3 + $0x1c] sm:$0xf]
          %v825 = vpack.c.bf16 %v794, %v793
          %v826 = vpack.c.bf16 %v796, %v795
          %v827 = vpack.c.bf16 %v798, %v797
          %v828 = vpack.c.bf16 %v800, %v799
          %v829 = vpack.c.bf16 %v802, %v801
          %v830 = vpack.c.bf16 %v804, %v803
          %v831 = vpack.c.bf16 %v806, %v805
          %v832 = vpack.c.bf16 %v808, %v807
          %v833 = vld [vmem:[%s4] sm:$0xf]
          %v834 = vld [vmem:[%s4 + $0x4] sm:$0xf]
          %v835 = vld [vmem:[%s4 + $0x8] sm:$0xf]
          %v836 = vld [vmem:[%s4 + $0xc] sm:$0xf]
          %v837 = vld [vmem:[%s4 + $0x10] sm:$0xf]
          %v838 = vld [vmem:[%s4 + $0x14] sm:$0xf]
          %v839 = vld [vmem:[%s4 + $0x18] sm:$0xf]
          %v840 = vld [vmem:[%s4 + $0x1c] sm:$0xf]
          %v849 = vunpack.c.l.b16 %v833
          %v850 = vunpack.c.l.b16 %v834
          %v851 = vunpack.c.l.b16 %v835
          %v852 = vunpack.c.l.b16 %v836
          %v853 = vunpack.c.l.b16 %v837
          %v854 = vunpack.c.l.b16 %v838
          %v855 = vunpack.c.l.b16 %v839
          %v856 = vunpack.c.l.b16 %v840
          %v857 = vpack.c.b16 %v850, %v849
          %v858 = vpack.c.b16 %v852, %v851
          %v859 = vpack.c.b16 %v854, %v853
          %v860 = vpack.c.b16 %v856, %v855
          %v866 = vsel %vm709, %v825, 0
          %v869 = vsel %vm709, %v826, 0
          %v872 = vsel %vm709, %v827, 0
          %v875 = vsel %vm709, %v828, 0
          %v878 = vsel %vm709, %v829, 0
          %v881 = vsel %vm709, %v830, 0
          %v884 = vsel %vm709, %v831, 0
          %v887 = vsel %vm709, %v832, 0
          %889 = vmatpush.bf16.msra.mxu0 0
          %890 = vmatpush.bf16.msra.mxu0 0
          %891 = vmatpush.bf16.msra.mxu0 0
          %892 = vmatpush.bf16.msra.mxu0 0
          %893 = vmatpush.bf16.msra.mxu0 %v860
          %894 = vmatpush.bf16.msra.mxu0 %v859
          %895 = vmatpush.bf16.msra.mxu0 %v858
          %896 = vmatpush.bf16.msra.mxu0 %v857
          %897 = vmatmul.bf16.gmra.mxu0 %v866
          %v898 = vpop.f32.mrf.mxu0
          %v899 = vadd.f32 0.0, %v898
          %v900 = vpop.f32.mrf.mxu0
          %v901 = vadd.f32 0.0, %v900
          %902 = vmatmul.bf16.gmra.mxu0 %v869
          %v903 = vpop.f32.mrf.mxu0
          %v904 = vadd.f32 0.0, %v903
          %v905 = vpop.f32.mrf.mxu0
          %v906 = vadd.f32 0.0, %v905
          %907 = vmatmul.bf16.gmra.mxu0 %v872
          %v908 = vpop.f32.mrf.mxu0
          %v909 = vadd.f32 0.0, %v908
          %v910 = vpop.f32.mrf.mxu0
          %v911 = vadd.f32 0.0, %v910
          %912 = vmatmul.bf16.gmra.mxu0 %v875
          %v913 = vpop.f32.mrf.mxu0
          %v914 = vadd.f32 0.0, %v913
          %v915 = vpop.f32.mrf.mxu0
          %v916 = vadd.f32 0.0, %v915
          %917 = vmatmul.bf16.gmra.mxu0 %v878
          %v918 = vpop.f32.mrf.mxu0
          %v919 = vadd.f32 0.0, %v918
          %v920 = vpop.f32.mrf.mxu0
          %v921 = vadd.f32 0.0, %v920
          %922 = vmatmul.bf16.gmra.mxu0 %v881
          %v923 = vpop.f32.mrf.mxu0
          %v924 = vadd.f32 0.0, %v923
          %v925 = vpop.f32.mrf.mxu0
          %v926 = vadd.f32 0.0, %v925
          %927 = vmatmul.bf16.gmra.mxu0 %v884
          %v928 = vpop.f32.mrf.mxu0
          %v929 = vadd.f32 0.0, %v928
          %v930 = vpop.f32.mrf.mxu0
          %v931 = vadd.f32 0.0, %v930
          %932 = vmatmul.bf16.gmra.mxu0 %v887
          %v933 = vpop.f32.mrf.mxu0
          %v934 = vadd.f32 0.0, %v933
          %v935 = vpop.f32.mrf.mxu0
          %v936 = vadd.f32 0.0, %v935
          %937 = vdwg.mxu0
          %v946 = vunpack.c.l.b16 %v817
          %v947 = vunpack.c.l.b16 %v818
          %v948 = vunpack.c.l.b16 %v819
          %v949 = vunpack.c.l.b16 %v820
          %v950 = vunpack.c.l.b16 %v821
          %v951 = vunpack.c.l.b16 %v822
          %v952 = vunpack.c.l.b16 %v823
          %v953 = vunpack.c.l.b16 %v824
          %v954 = vpack.c.b16 %v947, %v946
          %v955 = vpack.c.b16 %v949, %v948
          %v956 = vpack.c.b16 %v951, %v950
          %v957 = vpack.c.b16 %v953, %v952
          %v963 = vsel %vm709, %v809, 0
          %v966 = vsel %vm709, %v810, 0
          %v969 = vsel %vm709, %v811, 0
          %v972 = vsel %vm709, %v812, 0
          %v975 = vsel %vm709, %v813, 0
          %v978 = vsel %vm709, %v814, 0
          %v981 = vsel %vm709, %v815, 0
          %v984 = vsel %vm709, %v816, 0
          %986 = vmatpush.bf16.msra.mxu0 0
          %987 = vmatpush.bf16.msra.mxu0 0
          %988 = vmatpush.bf16.msra.mxu0 0
          %989 = vmatpush.bf16.msra.mxu0 0
          %990 = vmatpush.bf16.msra.mxu0 %v957
          %991 = vmatpush.bf16.msra.mxu0 %v956
          %992 = vmatpush.bf16.msra.mxu0 %v955
          %993 = vmatpush.bf16.msra.mxu0 %v954
          %994 = vmatmul.bf16.gmra.mxu0 %v963
          %v995 = vpop.f32.mrf.mxu0
          %v996 = vadd.f32 %v899, %v995
          %v997 = vpop.f32.mrf.mxu0
          %v998 = vadd.f32 %v901, %v997
          %999 = vmatmul.bf16.gmra.mxu0 %v966
          %v1000 = vpop.f32.mrf.mxu0
          %v1001 = vadd.f32 %v904, %v1000
          %v1002 = vpop.f32.mrf.mxu0
          %v1003 = vadd.f32 %v906, %v1002
          %1004 = vmatmul.bf16.gmra.mxu0 %v969
          %v1005 = vpop.f32.mrf.mxu0
          %v1006 = vadd.f32 %v909, %v1005
          %v1007 = vpop.f32.mrf.mxu0
          %v1008 = vadd.f32 %v911, %v1007
          %1009 = vmatmul.bf16.gmra.mxu0 %v972
          %v1010 = vpop.f32.mrf.mxu0
          %v1011 = vadd.f32 %v914, %v1010
          %v1012 = vpop.f32.mrf.mxu0
          %v1013 = vadd.f32 %v916, %v1012
          %1014 = vmatmul.bf16.gmra.mxu0 %v975
          %v1015 = vpop.f32.mrf.mxu0
          %v1016 = vadd.f32 %v919, %v1015
          %v1017 = vpop.f32.mrf.mxu0
          %v1018 = vadd.f32 %v921, %v1017
          %1019 = vmatmul.bf16.gmra.mxu0 %v978
          %v1020 = vpop.f32.mrf.mxu0
          %v1021 = vadd.f32 %v924, %v1020
          %v1022 = vpop.f32.mrf.mxu0
          %v1023 = vadd.f32 %v926, %v1022
          %1024 = vmatmul.bf16.gmra.mxu0 %v981
          %v1025 = vpop.f32.mrf.mxu0
          %v1026 = vadd.f32 %v929, %v1025
          %v1027 = vpop.f32.mrf.mxu0
          %v1028 = vadd.f32 %v931, %v1027
          %1029 = vmatmul.bf16.gmra.mxu0 %v984
          %v1030 = vpop.f32.mrf.mxu0
          %v1031 = vadd.f32 %v934, %v1030
          %v1032 = vpop.f32.mrf.mxu0
          %v1033 = vadd.f32 %v936, %v1032
          %1034 = vdwg.mxu0
          %v1035 = vld [vmem:[%s333] sm:$0xff]
          %v1036 = vld [vmem:[%s333 + $0x8] sm:$0xff]
          %v1037 = vld [vmem:[%s333 + $0x10] sm:$0xff]
          %v1038 = vld [vmem:[%s333 + $0x18] sm:$0xff]
          %v1039 = vld [vmem:[%s333 + $0x20] sm:$0xff]
          %v1040 = vld [vmem:[%s333 + $0x28] sm:$0xff]
          %v1041 = vld [vmem:[%s333 + $0x30] sm:$0xff]
          %v1042 = vld [vmem:[%s333 + $0x38] sm:$0xff]
          %v1043 = vld [vmem:[%s333 + $0x40] sm:$0xff]
          %v1044 = vld [vmem:[%s333 + $0x48] sm:$0xff]
          %v1045 = vld [vmem:[%s333 + $0x50] sm:$0xff]
          %v1046 = vld [vmem:[%s333 + $0x58] sm:$0xff]
          %v1047 = vld [vmem:[%s333 + $0x60] sm:$0xff]
          %v1048 = vld [vmem:[%s333 + $0x68] sm:$0xff]
          %v1049 = vld [vmem:[%s333 + $0x70] sm:$0xff]
          %v1050 = vld [vmem:[%s333 + $0x78] sm:$0xff]
          %v1051 = vadd.f32 %v996, %v1035
          %v1052 = vadd.f32 %v998, %v1036
          %v1053 = vadd.f32 %v1001, %v1037
          %v1054 = vadd.f32 %v1003, %v1038
          %v1055 = vadd.f32 %v1006, %v1039
          %v1056 = vadd.f32 %v1008, %v1040
          %v1057 = vadd.f32 %v1011, %v1041
          %v1058 = vadd.f32 %v1013, %v1042
          %v1059 = vadd.f32 %v1016, %v1043
          %v1060 = vadd.f32 %v1018, %v1044
          %v1061 = vadd.f32 %v1021, %v1045
          %v1062 = vadd.f32 %v1023, %v1046
          %v1063 = vadd.f32 %v1026, %v1047
          %v1064 = vadd.f32 %v1028, %v1048
          %v1065 = vadd.f32 %v1031, %v1049
          %v1066 = vadd.f32 %v1033, %v1050
          %1067 = vst [vmem:[%s320] sm:$0xff] %v1051
          %1068 = vst [vmem:[%s320 + $0x8] sm:$0xff] %v1052
          %1069 = vst [vmem:[%s320 + $0x10] sm:$0xff] %v1053
          %1070 = vst [vmem:[%s320 + $0x18] sm:$0xff] %v1054
          %1071 = vst [vmem:[%s320 + $0x20] sm:$0xff] %v1055
          %1072 = vst [vmem:[%s320 + $0x28] sm:$0xff] %v1056
          %1073 = vst [vmem:[%s320 + $0x30] sm:$0xff] %v1057
          %1074 = vst [vmem:[%s320 + $0x38] sm:$0xff] %v1058
          %1075 = vst [vmem:[%s320 + $0x40] sm:$0xff] %v1059
          %1076 = vst [vmem:[%s320 + $0x48] sm:$0xff] %v1060
          %1077 = vst [vmem:[%s320 + $0x50] sm:$0xff] %v1061
          %1078 = vst [vmem:[%s320 + $0x58] sm:$0xff] %v1062
          %1079 = vst [vmem:[%s320 + $0x60] sm:$0xff] %v1063
          %1080 = vst [vmem:[%s320 + $0x68] sm:$0xff] %v1064
          %1081 = vst [vmem:[%s320 + $0x70] sm:$0xff] %v1065
          %1082 = vst [vmem:[%s320 + $0x78] sm:$0xff] %v1066
        $region56: #{tpu_custom_call.1} parent=43 // pred_fallthru
          _
        %s1083 = sand.u32 %s186, 1
        %s1084 = scalar_lea.sflag [#allocation5], %s1083
        %s1085 = sand.u32 %s186, 1
        %s1086 = smul.addr %s1085, 128
        %s1087 = scalar_lea.vmem [#allocation6], %s1086
        // Predicated region
        $region57: #{tpu_custom_call.1} parent=43 // pred_check
          %p1088 = pneg %p196
        $region58: #{tpu_custom_call.1} parent=43 // pred_check_branch
          %1090 = sbr.rel (%p1088) target = $region60
        $region59: #{tpu_custom_call.1} parent=43 // pred_region
          %s1091 = smul.u32 16, %s27
          %1093 = vsyncadd %s1084, 0
          %s1094 = smul.addr %s1091, 8
          %s1095 = scalar_lea.hbm %s6, %s1094
          %s1096 = sshll.u32 %s1087, 4
          %s1097 = int_to_ptr.vmem [resolvable:$true] %s1096
          %s1098 = sshll.u32 %s1095, 4
          %s1099 = int_to_ptr.hbm [resolvable:$true] %s1098
          %1104 = dma.vmem_to_hbm [thread:$0]  %s1097, 2048, %s1099, %s1084, 128, 128, 8
        $region60: #{tpu_custom_call.1} parent=43 // pred_fallthru
          _
      $region44: #{tpu_custom_call.1} parent=5 // pred_fallthru
        _
      %p1105 = scmp.le.s32.totalorder 2, %s18
      // Predicated region
      $region61: #{tpu_custom_call.1} parent=5 // pred_check
        %p1106 = pneg %p1105
      $region62: #{tpu_custom_call.1} parent=5 // pred_check_branch
        %1108 = sbr.rel (%p1106) target = $region64
      $region63: #{tpu_custom_call.1} parent=5 // pred_region
        %s1109 = ssub.s32 %s18, 2
        // Predicated region
        $region65: #{tpu_custom_call.1} parent=63 // pred_check
          %p1110 = pneg %p202
        $region66: #{tpu_custom_call.1} parent=63 // pred_check_branch
          %1112 = sbr.rel (%p1110) target = $region68
        $region67: #{tpu_custom_call.1} parent=63 // pred_region
          %s1113 = sand.u32 %s187, 1
          %s1114 = scalar_lea.sflag [#allocation5], %s1113
          %s1115 = sand.u32 %s187, 1
          %s1116 = smul.addr %s1115, 128
          %s1117 = scalar_lea.vmem [#allocation6], %s1116
          %1119 = dma.done %s1114, 2048
        $region68: #{tpu_custom_call.1} parent=63 // pred_fallthru
          _
      $region64: #{tpu_custom_call.1} parent=5 // pred_fallthru
        _
    $region6: #{tpu_custom_call.1} parent=1 // loop_footer
      %s22 = sadd.s32 1, %s18
    $region7: #{tpu_custom_call.1} parent=1 // loop_footer_branch
      %17 = sbr.rel target = $region3
    $region8: #{tpu_custom_call.1} parent=1 // loop_exit
      _
    %1120 = vsyncpa [#allocation4], 1
    %s1121 = scalar_lea.sflag [#allocation4], 1
    %1122 = vsyncpa %s1121, 1
    %1123 = vsyncpa [#allocation5], 1
    %s1124 = scalar_lea.sflag [#allocation5], 1
    %1125 = vsyncpa %s1124, 1

</llo_original>
